<compile_context>
chip_gen: v7x
topology: tpu7x:2x2x1
jax: 0.10.0
libtpu: 0.0.40
codegen_flags: <defaults>
</compile_context>

<pallas_src>
import functools

import jax
import jax.numpy as jnp
from jax.experimental import pallas as pl
from jax.experimental.pallas import tpu as pltpu


_KX = ((-1.0, 0.0, 1.0), (-2.0, 0.0, 2.0), (-1.0, 0.0, 1.0))
_KY = ((-1.0, -2.0, -1.0), (0.0, 0.0, 0.0), (1.0, 2.0, 1.0))


def _round_up(n, m):
    return ((n + m - 1) // m) * m


def _pick_tile(n, cap=512):
    # n is a multiple of 128; pick the largest multiple of 128 <= cap dividing n.
    t = (min(cap, n) // 128) * 128
    while t > 128 and n % t:
        t -= 128
    return max(t, 128)


# --------------------------------- kernels ----------------------------------
def _sobel_grad_kernel(xp_ref, gx_ref, gy_ref, *, H, W):
    # xp_ref block: (1, C, H+2, W+2)  (already zero-padded for padding=1).
    # Same 3x3 kernel for every (out, in) pair  =>  stencil on the channel sum.
    xs = jnp.sum(xp_ref[0].astype(jnp.float32), axis=0)          # [H+2, W+2]
    gx = None
    gy = None
    for ky in range(3):
        for kx in range(3):
            wx, wy = _KX[ky][kx], _KY[ky][kx]
            if wx == 0.0 and wy == 0.0:
                continue
            tap = xs[ky:ky + H, kx:kx + W]                       # shifted slice
            if wx != 0.0:
                gx = wx * tap if gx is None else gx + wx * tap
            if wy != 0.0:
                gy = wy * tap if gy is None else gy + wy * tap
    gx_ref[0] = jnp.abs(gx)
    gy_ref[0] = jnp.abs(gy)


def _bmm_kernel(sx_ref, sy_ref, o_ref, acc_ref):
    # Per-batch A = Sx @ Sy^T, contraction (K) tiled on the last grid axis.
    @pl.when(pl.program_id(1) == 0)
    def _():
        acc_ref[...] = jnp.zeros_like(acc_ref)

    acc_ref[...] += jax.lax.dot_general(
        sx_ref[0], sy_ref[0], (((1,), (1,)), ((), ())),
        preferred_element_type=jnp.float32)

    @pl.when(pl.program_id(1) == pl.num_programs(1) - 1)
    def _():
        o_ref[0] = acc_ref[...]


def _softmax_dim0_kernel(a_ref, o_ref):
    # Softmax over the batch axis (PyTorch nn.Softmax() legacy dim for 3-D).
    a = a_ref[...]                                               # [B, TC]
    m = jnp.max(a, axis=0, keepdims=True)
    e = jnp.exp(a - m)
    o_ref[...] = e / jnp.sum(e, axis=0, keepdims=True)


# --------------------------------- wrapper ----------------------------------
def sobel_forward(x, out_channel):
    x = x.astype(jnp.float32)
    B, C, H, W = x.shape

    # zero padding for the 3x3 conv (glue)
    xpad = jnp.pad(x, ((0, 0), (0, 0), (1, 1), (1, 1)))

    grad = functools.partial(_sobel_grad_kernel, H=H, W=W)
    gx, gy = pl.pallas_call(
        grad,
        grid=(B,),
        in_specs=[pl.BlockSpec((1, C, H + 2, W + 2), lambda b: (b, 0, 0, 0))],
        out_specs=(pl.BlockSpec((1, H, W), lambda b: (b, 0, 0)),
                   pl.BlockSpec((1, H, W), lambda b: (b, 0, 0))),
        out_shape=(jax.ShapeDtypeStruct((B, H, W), jnp.float32),
                   jax.ShapeDtypeStruct((B, H, W), jnp.float32)),
        compiler_params=pltpu.CompilerParams(dimension_semantics=("parallel",)),
    )(xpad)

    # conv2d with the expanded Sobel weight just replicates the gradient map
    # over out_channel channels; replicate + PyTorch-style .view reshape (glue).
    sx = jnp.broadcast_to(gx[:, None, :, :], (B, out_channel, H, W))
    sy = jnp.broadcast_to(gy[:, None, :, :], (B, out_channel, H, W))
    rows = H if C == 1 else C
    assert (out_channel * H * W) % rows == 0, "view(b, rows, -1) must be exact"
    M = (out_channel * H * W) // rows
    Sx = sx.reshape(B, rows, M)
    Sy = sy.reshape(B, rows, M)

    # Pad contraction dim to a lane-aligned multiple of 128 (zeros are inert).
    M_pad = _round_up(M, 128)
    if M_pad != M:
        pad = ((0, 0), (0, 0), (0, M_pad - M))
        Sx = jnp.pad(Sx, pad)
        Sy = jnp.pad(Sy, pad)
    TK = _pick_tile(M_pad, cap=512)

    A = pl.pallas_call(
        _bmm_kernel,
        grid=(B, M_pad // TK),
        in_specs=[pl.BlockSpec((1, rows, TK), lambda b, k: (b, 0, k)),
                  pl.BlockSpec((1, rows, TK), lambda b, k: (b, 0, k))],
        out_specs=pl.BlockSpec((1, rows, rows), lambda b, k: (b, 0, 0)),
        out_shape=jax.ShapeDtypeStruct((B, rows, rows), jnp.float32),
        scratch_shapes=[pltpu.VMEM((rows, rows), jnp.float32)],
        compiler_params=pltpu.CompilerParams(
            dimension_semantics=("parallel", "arbitrary")),
    )(Sx, Sy)

    # nn.Softmax() on a 3-D tensor -> softmax along dim 0 (legacy default).
    Rsq = rows * rows
    Rsq_pad = _round_up(Rsq, 128)
    Af = A.reshape(B, Rsq)
    if Rsq_pad != Rsq:
        Af = jnp.pad(Af, ((0, 0), (0, Rsq_pad - Rsq)))
    TC = _pick_tile(Rsq_pad, cap=1024)

    out = pl.pallas_call(
        _softmax_dim0_kernel,
        grid=(Rsq_pad // TC,),
        in_specs=[pl.BlockSpec((B, TC), lambda j: (0, j))],
        out_specs=pl.BlockSpec((B, TC), lambda j: (0, j)),
        out_shape=jax.ShapeDtypeStruct((B, Rsq_pad), jnp.float32),
        compiler_params=pltpu.CompilerParams(dimension_semantics=("parallel",)),
    )(Af)

    return out[:, :Rsq].reshape(B, rows, rows)


# --------------------------- pure-JAX reference ------------------------------
def _sobel_reference(x, out_channel):
    B, C, H, W = x.shape
    kx = jnp.asarray(_KX, jnp.float32)
    ky = jnp.asarray(_KY, jnp.float32)
    wx = jnp.broadcast_to(kx, (out_channel, C, 3, 3))
    wy = jnp.broadcast_to(ky, (out_channel, C, 3, 3))
    dn = jax.lax.conv_dimension_numbers(x.shape, wx.shape,
                                        ('NCHW', 'OIHW', 'NCHW'))
    sx = jnp.abs(jax.lax.conv_general_dilated(
        x, wx, (1, 1), ((1, 1), (1, 1)), dimension_numbers=dn))
    sy = jnp.abs(jax.lax.conv_general_dilated(
        x, wy, (1, 1), ((1, 1), (1, 1)), dimension_numbers=dn))
    rows = H if C == 1 else C
    M = (out_channel * H * W) // rows
    Sx = sx.reshape(B, rows, M)
    Sy = sy.reshape(B, rows, M)
    A = jnp.einsum('bim,bjm->bij', Sx, Sy)
    return jax.nn.softmax(A, axis=0)          # nn.Softmax() legacy dim for 3-D


if __name__ == "__main__":
    key = jax.random.PRNGKey(0)
    B, Cin, H, W = 2, 4, 16, 16
    out_channel = 4
    x = jax.random.normal(key, (B, Cin, H, W), jnp.float32)

    fwd = jax.jit(functools.partial(sobel_forward, out_channel=out_channel))
    out = jax.block_until_ready(fwd(x))

    assert out.shape == (B, Cin, Cin), out.shape
    assert bool(jnp.all(jnp.isfinite(out)))

    ref = _sobel_reference(x, out_channel)
    assert bool(jnp.allclose(out, ref, rtol=1e-3, atol=1e-3)), (
        float(jnp.max(jnp.abs(out - ref))))

    print("KERNEL_OK")
</pallas_src>

<mosaic_0001>
module attributes {stable_mosaic.version = 11 : i64} {
  func.func @_sobel_grad_kernel(%arg0: i32, %arg1: memref<1x4x18x18xf32, #tpu.memory_space<vmem>>, %arg2: memref<1x16x16xf32, #tpu.memory_space<vmem>>, %arg3: memref<1x16x16xf32, #tpu.memory_space<vmem>>) attributes {dimension_semantics = [#tpu.dimension_semantics<parallel>], iteration_bounds = array<i64: 2>, scalar_prefetch = 0 : i64, scratch_operands = 0 : i64, tpu.core_type = #tpu.core_type<tc>, window_params = [{transform_indices = @transform_0, window_bounds = array<i64: 1, 4, 18, 18>}, {transform_indices = @transform_1, window_bounds = array<i64: 1, 16, 16>}, {transform_indices = @transform_2, window_bounds = array<i64: 1, 16, 16>}]} {
    %c0 = arith.constant 0 : index
    %c0_0 = arith.constant 0 : index
    %c0_1 = arith.constant 0 : index
    %c0_2 = arith.constant 0 : index
    %0 = vector.load %arg1[%c0, %c0_0, %c0_1, %c0_2] : memref<1x4x18x18xf32, #tpu.memory_space<vmem>>, vector<1x4x18x18xf32>
    %1 = vector.shape_cast %0 : vector<1x4x18x18xf32> to vector<4x18x18xf32>
    %cst = arith.constant dense<0.000000e+00> : vector<18x18xf32>
    %2 = vector.multi_reduction <add>, %1, %cst [0] : vector<4x18x18xf32> to vector<18x18xf32>
    %3 = vector.extract_strided_slice %2 {offsets = [0, 0], sizes = [16, 16], strides = [1, 1]} : vector<18x18xf32> to vector<16x16xf32>
    %cst_3 = arith.constant -1.000000e+00 : f32
    %4 = vector.broadcast %cst_3 : f32 to vector<16x16xf32>
    %5 = arith.mulf %4, %3 : vector<16x16xf32>
    %cst_4 = arith.constant -1.000000e+00 : f32
    %6 = vector.broadcast %cst_4 : f32 to vector<16x16xf32>
    %7 = arith.mulf %6, %3 : vector<16x16xf32>
    %8 = vector.extract_strided_slice %2 {offsets = [0, 1], sizes = [16, 16], strides = [1, 1]} : vector<18x18xf32> to vector<16x16xf32>
    %cst_5 = arith.constant -2.000000e+00 : f32
    %9 = vector.broadcast %cst_5 : f32 to vector<16x16xf32>
    %10 = arith.mulf %9, %8 : vector<16x16xf32>
    %11 = arith.addf %7, %10 : vector<16x16xf32>
    %12 = vector.extract_strided_slice %2 {offsets = [0, 2], sizes = [16, 16], strides = [1, 1]} : vector<18x18xf32> to vector<16x16xf32>
    %cst_6 = arith.constant 1.000000e+00 : f32
    %13 = vector.broadcast %cst_6 : f32 to vector<16x16xf32>
    %14 = arith.mulf %13, %12 : vector<16x16xf32>
    %15 = arith.addf %5, %14 : vector<16x16xf32>
    %cst_7 = arith.constant -1.000000e+00 : f32
    %16 = vector.broadcast %cst_7 : f32 to vector<16x16xf32>
    %17 = arith.mulf %16, %12 : vector<16x16xf32>
    %18 = arith.addf %11, %17 : vector<16x16xf32>
    %19 = vector.extract_strided_slice %2 {offsets = [1, 0], sizes = [16, 16], strides = [1, 1]} : vector<18x18xf32> to vector<16x16xf32>
    %cst_8 = arith.constant -2.000000e+00 : f32
    %20 = vector.broadcast %cst_8 : f32 to vector<16x16xf32>
    %21 = arith.mulf %20, %19 : vector<16x16xf32>
    %22 = arith.addf %15, %21 : vector<16x16xf32>
    %23 = vector.extract_strided_slice %2 {offsets = [1, 2], sizes = [16, 16], strides = [1, 1]} : vector<18x18xf32> to vector<16x16xf32>
    %cst_9 = arith.constant 2.000000e+00 : f32
    %24 = vector.broadcast %cst_9 : f32 to vector<16x16xf32>
    %25 = arith.mulf %24, %23 : vector<16x16xf32>
    %26 = arith.addf %22, %25 : vector<16x16xf32>
    %27 = vector.extract_strided_slice %2 {offsets = [2, 0], sizes = [16, 16], strides = [1, 1]} : vector<18x18xf32> to vector<16x16xf32>
    %cst_10 = arith.constant -1.000000e+00 : f32
    %28 = vector.broadcast %cst_10 : f32 to vector<16x16xf32>
    %29 = arith.mulf %28, %27 : vector<16x16xf32>
    %30 = arith.addf %26, %29 : vector<16x16xf32>
    %cst_11 = arith.constant 1.000000e+00 : f32
    %31 = vector.broadcast %cst_11 : f32 to vector<16x16xf32>
    %32 = arith.mulf %31, %27 : vector<16x16xf32>
    %33 = arith.addf %18, %32 : vector<16x16xf32>
    %34 = vector.extract_strided_slice %2 {offsets = [2, 1], sizes = [16, 16], strides = [1, 1]} : vector<18x18xf32> to vector<16x16xf32>
    %cst_12 = arith.constant 2.000000e+00 : f32
    %35 = vector.broadcast %cst_12 : f32 to vector<16x16xf32>
    %36 = arith.mulf %35, %34 : vector<16x16xf32>
    %37 = arith.addf %33, %36 : vector<16x16xf32>
    %38 = vector.extract_strided_slice %2 {offsets = [2, 2], sizes = [16, 16], strides = [1, 1]} : vector<18x18xf32> to vector<16x16xf32>
    %cst_13 = arith.constant 1.000000e+00 : f32
    %39 = vector.broadcast %cst_13 : f32 to vector<16x16xf32>
    %40 = arith.mulf %39, %38 : vector<16x16xf32>
    %41 = arith.addf %30, %40 : vector<16x16xf32>
    %cst_14 = arith.constant 1.000000e+00 : f32
    %42 = vector.broadcast %cst_14 : f32 to vector<16x16xf32>
    %43 = arith.mulf %42, %38 : vector<16x16xf32>
    %44 = arith.addf %37, %43 : vector<16x16xf32>
    %45 = math.absf %41 : vector<16x16xf32>
    %c0_15 = arith.constant 0 : index
    %c0_16 = arith.constant 0 : index
    %c0_17 = arith.constant 0 : index
    %46 = vector.load %arg2[%c0_15, %c0_16, %c0_17] : memref<1x16x16xf32, #tpu.memory_space<vmem>>, vector<1x16x16xf32>
    %47 = vector.shape_cast %46 : vector<1x16x16xf32> to vector<16x16xf32>
    %48 = vector.shape_cast %45 : vector<16x16xf32> to vector<1x16x16xf32>
    tpu.vector_store %arg2[%c0_15, %c0_16, %c0_17], %48 {strides = array<i32>} : memref<1x16x16xf32, #tpu.memory_space<vmem>>, vector<1x16x16xf32>,
    %49 = math.absf %44 : vector<16x16xf32>
    %c0_18 = arith.constant 0 : index
    %c0_19 = arith.constant 0 : index
    %c0_20 = arith.constant 0 : index
    %50 = vector.load %arg3[%c0_18, %c0_19, %c0_20] : memref<1x16x16xf32, #tpu.memory_space<vmem>>, vector<1x16x16xf32>
    %51 = vector.shape_cast %50 : vector<1x16x16xf32> to vector<16x16xf32>
    %52 = vector.shape_cast %49 : vector<16x16xf32> to vector<1x16x16xf32>
    tpu.vector_store %arg3[%c0_18, %c0_19, %c0_20], %52 {strides = array<i32>} : memref<1x16x16xf32, #tpu.memory_space<vmem>>, vector<1x16x16xf32>,
    return
  }
  func.func @transform_0(%arg0: i32) -> (i32, i32, i32, i32) {
    %c0_i32 = arith.constant 0 : i32
    %c0_i32_0 = arith.constant 0 : i32
    %c0_i32_1 = arith.constant 0 : i32
    %c0_i32_2 = arith.constant 0 : i32
    return %arg0, %c0_i32, %c0_i32_0, %c0_i32_1 : i32, i32, i32, i32
  }
  func.func @transform_1(%arg0: i32) -> (i32, i32, i32) {
    %c0_i32 = arith.constant 0 : i32
    %c0_i32_0 = arith.constant 0 : i32
    %c0_i32_1 = arith.constant 0 : i32
    return %arg0, %c0_i32, %c0_i32_0 : i32, i32, i32
  }
  func.func @transform_2(%arg0: i32) -> (i32, i32, i32) {
    %c0_i32 = arith.constant 0 : i32
    %c0_i32_0 = arith.constant 0 : i32
    %c0_i32_1 = arith.constant 0 : i32
    return %arg0, %c0_i32, %c0_i32_0 : i32, i32, i32
  }
}

module attributes {stable_mosaic.version = 11 : i64} {
  func.func @_bmm_kernel(%arg0: i32, %arg1: i32, %arg2: memref<1x4x256xf32, #tpu.memory_space<vmem>>, %arg3: memref<1x4x256xf32, #tpu.memory_space<vmem>>, %arg4: memref<1x4x4xf32, #tpu.memory_space<vmem>>, %arg5: memref<4x4xf32, #tpu.memory_space<vmem>>) attributes {dimension_semantics = [#tpu.dimension_semantics<parallel>, #tpu.dimension_semantics<arbitrary>], iteration_bounds = array<i64: 2, 1>, scalar_prefetch = 0 : i64, scratch_operands = 1 : i64, tpu.core_type = #tpu.core_type<tc>, window_params = [{transform_indices = @transform_0, window_bounds = array<i64: 1, 4, 256>}, {transform_indices = @transform_1, window_bounds = array<i64: 1, 4, 256>}, {transform_indices = @transform_2, window_bounds = array<i64: 1, 4, 4>}]} {
    %c0_i32 = arith.constant 0 : i32
    %0 = arith.cmpi eq, %arg1, %c0_i32 : i32
    %1 = arith.extui %0 : i1 to i32
    %c0_i32_0 = arith.constant 0 : i32
    %2 = arith.cmpi ne, %1, %c0_i32_0 : i32
    scf.if %2 {
      %cst_12 = arith.constant 0.000000e+00 : f32
      %14 = vector.broadcast %cst_12 : f32 to vector<4x4xf32>
      %c0_13 = arith.constant 0 : index
      %c0_14 = arith.constant 0 : index
      %15 = vector.load %arg5[%c0_13, %c0_14] : memref<4x4xf32, #tpu.memory_space<vmem>>, vector<4x4xf32>
      tpu.vector_store %arg5[%c0_13, %c0_14], %14 {strides = array<i32>} : memref<4x4xf32, #tpu.memory_space<vmem>>, vector<4x4xf32>,
    } else {
    }
    %c0 = arith.constant 0 : index
    %c0_1 = arith.constant 0 : index
    %3 = vector.load %arg5[%c0, %c0_1] : memref<4x4xf32, #tpu.memory_space<vmem>>, vector<4x4xf32>
    %c0_2 = arith.constant 0 : index
    %c0_3 = arith.constant 0 : index
    %c0_4 = arith.constant 0 : index
    %4 = vector.load %arg2[%c0_2, %c0_3, %c0_4] : memref<1x4x256xf32, #tpu.memory_space<vmem>>, vector<1x4x256xf32>
    %5 = vector.shape_cast %4 : vector<1x4x256xf32> to vector<4x256xf32>
    %c0_5 = arith.constant 0 : index
    %c0_6 = arith.constant 0 : index
    %c0_7 = arith.constant 0 : index
    %6 = vector.load %arg3[%c0_5, %c0_6, %c0_7] : memref<1x4x256xf32, #tpu.memory_space<vmem>>, vector<1x4x256xf32>
    %7 = vector.shape_cast %6 : vector<1x4x256xf32> to vector<4x256xf32>
    %cst = arith.constant dense<0.000000e+00> : vector<4x4xf32>
    %8 = tpu.matmul %5, %7, %cst {dimension_numbers = #tpu.dot_dimension_numbers<[1], [1], [0], [0], [0, 0, 1, 0], [], []>} : vector<4x256xf32>, vector<4x256xf32>, vector<4x4xf32> -> vector<4x4xf32>
    %9 = arith.addf %3, %8 : vector<4x4xf32>
    %c0_8 = arith.constant 0 : index
    %c0_9 = arith.constant 0 : index
    %10 = vector.load %arg5[%c0_8, %c0_9] : memref<4x4xf32, #tpu.memory_space<vmem>>, vector<4x4xf32>
    tpu.vector_store %arg5[%c0_8, %c0_9], %9 {strides = array<i32>} : memref<4x4xf32, #tpu.memory_space<vmem>>, vector<4x4xf32>,
    %c0_i32_10 = arith.constant 0 : i32
    %11 = arith.cmpi eq, %arg1, %c0_i32_10 : i32
    %12 = arith.extui %11 : i1 to i32
    %c0_i32_11 = arith.constant 0 : i32
    %13 = arith.cmpi ne, %12, %c0_i32_11 : i32
    scf.if %13 {
      %c0_12 = arith.constant 0 : index
      %c0_13 = arith.constant 0 : index
      %14 = vector.load %arg5[%c0_12, %c0_13] : memref<4x4xf32, #tpu.memory_space<vmem>>, vector<4x4xf32>
      %c0_14 = arith.constant 0 : index
      %c0_15 = arith.constant 0 : index
      %c0_16 = arith.constant 0 : index
      %15 = vector.load %arg4[%c0_14, %c0_15, %c0_16] : memref<1x4x4xf32, #tpu.memory_space<vmem>>, vector<1x4x4xf32>
      %16 = vector.shape_cast %15 : vector<1x4x4xf32> to vector<4x4xf32>
      %17 = vector.shape_cast %14 : vector<4x4xf32> to vector<1x4x4xf32>
      tpu.vector_store %arg4[%c0_14, %c0_15, %c0_16], %17 {strides = array<i32>} : memref<1x4x4xf32, #tpu.memory_space<vmem>>, vector<1x4x4xf32>,
    } else {
    }
    return
  }
  func.func @transform_0(%arg0: i32, %arg1: i32) -> (i32, i32, i32) {
    %c0_i32 = arith.constant 0 : i32
    %c0_i32_0 = arith.constant 0 : i32
    return %arg0, %c0_i32, %arg1 : i32, i32, i32
  }
  func.func @transform_1(%arg0: i32, %arg1: i32) -> (i32, i32, i32) {
    %c0_i32 = arith.constant 0 : i32
    %c0_i32_0 = arith.constant 0 : i32
    return %arg0, %c0_i32, %arg1 : i32, i32, i32
  }
  func.func @transform_2(%arg0: i32, %arg1: i32) -> (i32, i32, i32) {
    %c0_i32 = arith.constant 0 : i32
    %c0_i32_0 = arith.constant 0 : i32
    %c0_i32_1 = arith.constant 0 : i32
    return %arg0, %c0_i32, %c0_i32_0 : i32, i32, i32
  }
}

module attributes {stable_mosaic.version = 11 : i64} {
  func.func @_softmax_dim0_kernel(%arg0: i32, %arg1: memref<2x128xf32, #tpu.memory_space<vmem>>, %arg2: memref<2x128xf32, #tpu.memory_space<vmem>>) attributes {dimension_semantics = [#tpu.dimension_semantics<parallel>], iteration_bounds = array<i64: 1>, scalar_prefetch = 0 : i64, scratch_operands = 0 : i64, tpu.core_type = #tpu.core_type<tc>, window_params = [{transform_indices = @transform_0, window_bounds = array<i64: 2, 128>}, {transform_indices = @transform_1, window_bounds = array<i64: 2, 128>}]} {
    %c0 = arith.constant 0 : index
    %c0_0 = arith.constant 0 : index
    %0 = vector.load %arg1[%c0, %c0_0] : memref<2x128xf32, #tpu.memory_space<vmem>>, vector<2x128xf32>
    %cst = arith.constant dense<0xFF800000> : vector<128xf32>
    %1 = vector.multi_reduction <maximumf>, %0, %cst [0] : vector<2x128xf32> to vector<128xf32>
    %2 = vector.shape_cast %1 : vector<128xf32> to vector<1x128xf32>
    %3 = vector.broadcast %2 : vector<1x128xf32> to vector<2x128xf32>
    %4 = arith.subf %0, %3 : vector<2x128xf32>
    %5 = math.exp %4 : vector<2x128xf32>
    %cst_1 = arith.constant dense<0.000000e+00> : vector<128xf32>
    %6 = vector.multi_reduction <add>, %5, %cst_1 [0] : vector<2x128xf32> to vector<128xf32>
    %7 = vector.shape_cast %6 : vector<128xf32> to vector<1x128xf32>
    %8 = vector.broadcast %7 : vector<1x128xf32> to vector<2x128xf32>
    %9 = arith.divf %5, %8 : vector<2x128xf32>
    %c0_2 = arith.constant 0 : index
    %c0_3 = arith.constant 0 : index
    %10 = vector.load %arg2[%c0_2, %c0_3] : memref<2x128xf32, #tpu.memory_space<vmem>>, vector<2x128xf32>
    tpu.vector_store %arg2[%c0_2, %c0_3], %9 {strides = array<i32>} : memref<2x128xf32, #tpu.memory_space<vmem>>, vector<2x128xf32>,
    return
  }
  func.func @transform_0(%arg0: i32) -> (i32, i32) {
    %c0_i32 = arith.constant 0 : i32
    %c0_i32_0 = arith.constant 0 : i32
    return %c0_i32, %arg0 : i32, i32
  }
  func.func @transform_1(%arg0: i32) -> (i32, i32) {
    %c0_i32 = arith.constant 0 : i32
    %c0_i32_0 = arith.constant 0 : i32
    return %c0_i32, %arg0 : i32, i32
  }
}

</mosaic_0001>

<llo_original>
// kernel: sobel_forward.5
$region0: #{sobel_forward.5}
  #allocation0 [shape = 'u32[]', space=smem, size = 0x4, offset = 0x4, fixed_abs, tag = 'smem constant byte address 0x4 - core index']
  #allocation1 [shape = 'u32[144,128]{1,0:T(1,128)}', space=vmem, size = 0x12000, scoped, tag = 'internal scratch']
  %s0 = inlined_call_operand.vmem [shape: f32[2,128], index: 0, kind: input, shape index: {}]
  %s1 = inlined_call_operand.vmem [shape: f32[2,128], index: 1, kind: output, shape index: {}]
  %s2 = sld [smem:[#allocation0]]
  $region14: #{sobel_forward.5} parent=0
    _
  %s4 = ssub.s32 1, %s2
  %s5 = scalar_select 0, %s4, %s2
  // Predicated region
  $region2: #{sobel_forward.5} parent=0 // pred_check
    _
  $region3: #{sobel_forward.5} parent=0 // pred_check_branch
    %7 = sbr.rel (0) target = $region5
  $region4: #{sobel_forward.5} parent=0 // pred_region
    _
  $region5: #{sobel_forward.5} parent=0 // pred_fallthru
    _
  %v8 = vld [vmem:[%s0] sm:$0x3]
  %vm9 = vcmask 1041408
  %v10 = vsel %vm9, %v8, -inf
  %v11 = vrot.slane %v10, 4
  %v12 = vmax.f32 %v10, %v11
  %v13 = vrot.slane %v12, 2
  %v14 = vmax.f32 %v12, %v13
  %v15 = vrot.slane %v14, 1
  %v16 = vmax.f32 %v14, %v15
  %v17 = vsub.f32 %v8, %v16
  %v18 = vmul.f32 %v17, 1.442695
  %v19 = vpow.pop %v18
  %v20 = vsel %vm9, %v19, 0.0
  %v21 = vrot.slane %v20, 4
  %v22 = vadd.f32 %v20, %v21
  %v23 = vrot.slane %v22, 2
  %v24 = vadd.f32 %v22, %v23
  %v25 = vrot.slane %v24, 1
  %v26 = vadd.f32 %v24, %v25
  %v27 = vrcp.pop %v26
  %v28 = vmul.f32 %v19, %v27
  %29 = vst [vmem:[%s1] sm:$0x3] %v28
  // Predicated region
  $region6: #{sobel_forward.5} parent=0 // pred_check
    _
  $region7: #{sobel_forward.5} parent=0 // pred_check_branch
    %31 = sbr.rel (0) target = $region9
  $region8: #{sobel_forward.5} parent=0 // pred_region
    _
  $region9: #{sobel_forward.5} parent=0 // pred_fallthru
    _
  // Predicated region
  $region10: #{sobel_forward.5} parent=0 // pred_check
    _
  $region11: #{sobel_forward.5} parent=0 // pred_check_branch
    %33 = sbr.rel (0) target = $region13
  $region12: #{sobel_forward.5} parent=0 // pred_region
    _
  $region13: #{sobel_forward.5} parent=0 // pred_fallthru
    _

// kernel: sobel_forward.4
$region0: #{sobel_forward.4}
  #allocation0 [shape = 'u32[]', space=smem, size = 0x4, offset = 0x4, fixed_abs, tag = 'smem constant byte address 0x4 - core index']
  #allocation1 [shape = 'u32[144,128]{1,0:T(1,128)}', space=vmem, size = 0x12000, scoped, tag = 'internal scratch']
  #allocation2 [shape = 'f32[4,4]{1,0:T(4,128)}', space=vmem, size = 0x800, scoped, tag = 'scratch operand']
  %s0 = inlined_call_operand.vmem [shape: f32[2,4,256], index: 0, kind: input, shape index: {}]
  %s1 = inlined_call_operand.vmem [shape: f32[2,4,256], index: 1, kind: input, shape index: {}]
  %s2 = inlined_call_operand.vmem [shape: f32[2,4,4], index: 2, kind: output, shape index: {}]
  %s3 = sld [smem:[#allocation0]]
  $region49: #{sobel_forward.4} parent=0
    _
  %s5 = ssub.s32 1, %s3
  %s6 = scalar_select 0, %s5, %s3
  loop: start=0, step=1, limit=4
  $region2: #{sobel_forward.4} parent=0 // loop_pre_header
    _
  $region3: #{sobel_forward.4} parent=0 // loop_header
    %s8 = sphi 0, %s12
    %p9 = scmp.ge.s32.totalorder %s8, 4
    %s15 = sphi 0, %s27
    %s16 = sphi 0, %s23
    %s17 = sphi 0, %s15
    %s18 = sphi 0, %s16
    %s19 = sphi 0, %s17
    %s20 = sphi 0, %s18
    %s32 = sphi 0, %s34
    %s35 = sphi 0, %s32
    %s36 = sphi 0, %s35
    %s52 = sphi 0, %s36
    %s60 = sphi 0, %s62
    %s63 = sphi 0, %s60
    %s64 = sphi 0, %s63
    %s80 = sphi 0, %s64
    %s86 = sphi 0, %s88
    %s89 = sphi 0, %s86
    %s90 = sphi 0, %s89
    %s106 = sphi 0, %s90
  $region4: #{sobel_forward.4} parent=0 // loop_header_branch
    %11 = sbr.rel (%p9) target = $region8
  $region5: #{sobel_forward.4} parent=0 // loop_body
    %s13 = ssub.s32 %s8, 1
    %s14 = ssub.s32 %s8, 2
    %s21 = sadd.s32 1, %s16
    %p22 = scmp.ge.s32.totalorder %s21, 1
    %s23 = scalar_select %p22, 0, %s21
    %s24 = sadd.s32 1, %s15
    %s25 = scalar_select %p22, %s24, %s15
    %p26 = scmp.ge.s32.totalorder %s25, 2
    %s27 = scalar_select %p26, 0, %s25
    %s28 = ssub.s32 %s15, %s27
    %s29 = ssub.s32 %s16, %s23
    %s30 = sor.u32 %s28, %s29
    %p31 = scmp.eq.s32.totalorder %s30, 0
    %s33 = sadd.s32 %s32, 1
    %s34 = scalar_select %p31, %s32, %s33
    %p37 = pneg %p31
    %p38 = scmp.eq.s32.totalorder %s8, 1
    %p39 = por %p37, %p38
    %p40 = scmp.ne.s32.totalorder %s32, %s35
    %p41 = scmp.eq.s32.totalorder %s8, 0
    %p42 = por %p40, %p41
    %p43 = scmp.ne.s32.totalorder %s32, %s35
    %p44 = scmp.eq.s32.totalorder %s13, 1
    %p45 = por %p43, %p44
    %p46 = scmp.ne.s32.totalorder %s35, %s36
    %p47 = scmp.eq.s32.totalorder %s13, 0
    %p48 = por %p46, %p47
    %p49 = scmp.ne.s32.totalorder %s35, %s36
    %p50 = scmp.eq.s32.totalorder %s14, 1
    %p51 = por %p49, %p50
    %p53 = scmp.ne.s32.totalorder %s36, %s52
    %p54 = scmp.eq.s32.totalorder %s14, 0
    %p55 = por %p53, %p54
    %s56 = ssub.s32 %s15, %s27
    %s57 = ssub.s32 %s16, %s23
    %s58 = sor.u32 %s56, %s57
    %p59 = scmp.eq.s32.totalorder %s58, 0
    %s61 = sadd.s32 %s60, 1
    %s62 = scalar_select %p59, %s60, %s61
    %p65 = pneg %p59
    %p66 = scmp.eq.s32.totalorder %s8, 1
    %p67 = por %p65, %p66
    %p68 = scmp.ne.s32.totalorder %s60, %s63
    %p69 = scmp.eq.s32.totalorder %s8, 0
    %p70 = por %p68, %p69
    %p71 = scmp.ne.s32.totalorder %s60, %s63
    %p72 = scmp.eq.s32.totalorder %s13, 1
    %p73 = por %p71, %p72
    %p74 = scmp.ne.s32.totalorder %s63, %s64
    %p75 = scmp.eq.s32.totalorder %s13, 0
    %p76 = por %p74, %p75
    %p77 = scmp.ne.s32.totalorder %s63, %s64
    %p78 = scmp.eq.s32.totalorder %s14, 1
    %p79 = por %p77, %p78
    %p81 = scmp.ne.s32.totalorder %s64, %s80
    %p82 = scmp.eq.s32.totalorder %s14, 0
    %p83 = por %p81, %p82
    %s84 = ssub.s32 %s15, %s27
    %p85 = scmp.eq.s32.totalorder %s84, 0
    %s87 = sadd.s32 %s86, 1
    %s88 = scalar_select %p85, %s86, %s87
    %p91 = pneg %p85
    %p92 = scmp.eq.s32.totalorder %s8, 1
    %p93 = por %p91, %p92
    %p94 = scmp.ne.s32.totalorder %s86, %s89
    %p95 = scmp.eq.s32.totalorder %s8, 0
    %p96 = por %p94, %p95
    %p97 = scmp.ne.s32.totalorder %s86, %s89
    %p98 = scmp.eq.s32.totalorder %s13, 1
    %p99 = por %p97, %p98
    %p100 = scmp.ne.s32.totalorder %s89, %s90
    %p101 = scmp.eq.s32.totalorder %s13, 0
    %p102 = por %p100, %p101
    %p103 = scmp.ne.s32.totalorder %s89, %s90
    %p104 = scmp.eq.s32.totalorder %s14, 1
    %p105 = por %p103, %p104
    %p107 = scmp.ne.s32.totalorder %s90, %s106
    %p108 = scmp.eq.s32.totalorder %s14, 0
    %p109 = por %p107, %p108
    %p110 = scmp.le.s32.totalorder 1, %s8
    %p111 = scmp.lt.s32.totalorder %s8, 3
    %p112 = pnand %p110, %p111
    %p113 = pneg %p112
    // Predicated region
    $region9: #{sobel_forward.4} parent=5 // pred_check
      _
    $region10: #{sobel_forward.4} parent=5 // pred_check_branch
      %115 = sbr.rel (%p112) target = $region12
    $region11: #{sobel_forward.4} parent=5 // pred_region
      %s116 = ssub.s32 %s8, 1
    $region12: #{sobel_forward.4} parent=5 // pred_fallthru
      _
    %p117 = scmp.lt.s32.totalorder %s8, 2
    // Predicated region
    $region13: #{sobel_forward.4} parent=5 // pred_check
      %p118 = pneg %p117
    $region14: #{sobel_forward.4} parent=5 // pred_check_branch
      %120 = sbr.rel (%p118) target = $region16
    $region15: #{sobel_forward.4} parent=5 // pred_region
      // Predicated region
      $region17: #{sobel_forward.4} parent=15 // pred_check
        %p121 = pneg %p42
      $region18: #{sobel_forward.4} parent=15 // pred_check_branch
        %123 = sbr.rel (%p121) target = $region20
      $region19: #{sobel_forward.4} parent=15 // pred_region
        %s124 = smul.u32 2, %s16
        %p125 = scmp.lt.s32.totalorder %s15, 1
        %s126 = scalar_select %p125, %s15, 1
        %p127 = scmp.lt.s32.totalorder %s124, 1
        %s128 = scalar_select %p127, %s124, 1
        %s129 = smul.addr %s126, 2
        %s130 = sadd.s32 %s128, %s129
        %s131 = smul.addr %s130, 4
        %s132 = scalar_lea.vmem %s0, %s131
        %s133 = smul.u32 2, %s16
      $region20: #{sobel_forward.4} parent=15 // pred_fallthru
        _
      // Predicated region
      $region21: #{sobel_forward.4} parent=15 // pred_check
        %p134 = pneg %p70
      $region22: #{sobel_forward.4} parent=15 // pred_check_branch
        %136 = sbr.rel (%p134) target = $region24
      $region23: #{sobel_forward.4} parent=15 // pred_region
        %s137 = smul.u32 2, %s16
        %p138 = scmp.lt.s32.totalorder %s15, 1
        %s139 = scalar_select %p138, %s15, 1
        %p140 = scmp.lt.s32.totalorder %s137, 1
        %s141 = scalar_select %p140, %s137, 1
        %s142 = smul.addr %s139, 2
        %s143 = sadd.s32 %s141, %s142
        %s144 = smul.addr %s143, 4
        %s145 = scalar_lea.vmem %s1, %s144
        %s146 = smul.u32 2, %s16
      $region24: #{sobel_forward.4} parent=15 // pred_fallthru
        _
    $region16: #{sobel_forward.4} parent=5 // pred_fallthru
      _
    %p147 = scmp.le.s32.totalorder 1, %s8
    %p148 = scmp.lt.s32.totalorder %s8, 3
    %p149 = pnand %p147, %p148
    %p150 = pneg %p149
    // Predicated region
    $region25: #{sobel_forward.4} parent=5 // pred_check
      _
    $region26: #{sobel_forward.4} parent=5 // pred_check_branch
      %152 = sbr.rel (%p149) target = $region28
    $region27: #{sobel_forward.4} parent=5 // pred_region
      %s153 = ssub.s32 %s8, 1
      %s154 = smul.u32 2, %s18
      %p155 = scmp.lt.s32.totalorder %s17, 1
      %s156 = scalar_select %p155, %s17, 1
      %p157 = scmp.lt.s32.totalorder %s154, 1
      %s158 = scalar_select %p157, %s154, 1
      %s159 = smul.addr %s156, 2
      %s160 = sadd.s32 %s158, %s159
      %s161 = smul.addr %s160, 4
      %s162 = scalar_lea.vmem %s0, %s161
      %p163 = pneg %p48
      %p164 = pneg %p45
      %s165 = smul.u32 2, %s18
      %p166 = scmp.lt.s32.totalorder %s17, 1
      %s167 = scalar_select %p166, %s17, 1
      %p168 = scmp.lt.s32.totalorder %s165, 1
      %s169 = scalar_select %p168, %s165, 1
      %s170 = smul.addr %s167, 2
      %s171 = sadd.s32 %s169, %s170
      %s172 = smul.addr %s171, 4
      %s173 = scalar_lea.vmem %s1, %s172
      %p174 = pneg %p76
      %p175 = pneg %p73
      %p176 = pneg %p102
      %p177 = pneg %p99
      %p178 = scmp.lt.s32.totalorder %s17, 1
      %s179 = scalar_select %p178, %s17, 1
      %s180 = smul.addr %s179, 4
      %s181 = scalar_lea.vmem %s2, %s180
      %s182 = smul.u32 2, %s18
      %p183 = scmp.lt.s32.totalorder %s17, 1
      %s184 = scalar_select %p183, %s17, 1
      %p185 = scmp.lt.s32.totalorder %s182, 1
      %s186 = scalar_select %p185, %s182, 1
      %s187 = smul.addr %s184, 2
      %s188 = sadd.s32 %s186, %s187
      %s189 = smul.addr %s188, 4
      %s190 = scalar_lea.vmem %s0, %s189
      %s191 = smul.u32 2, %s18
      %s192 = smul.u32 2, %s18
      %p193 = scmp.lt.s32.totalorder %s17, 1
      %s194 = scalar_select %p193, %s17, 1
      %p195 = scmp.lt.s32.totalorder %s192, 1
      %s196 = scalar_select %p195, %s192, 1
      %s197 = smul.addr %s194, 2
      %s198 = sadd.s32 %s196, %s197
      %s199 = smul.addr %s198, 4
      %s200 = scalar_lea.vmem %s1, %s199
      %s201 = smul.u32 2, %s18
      %p202 = scmp.lt.s32.totalorder %s17, 1
      %s203 = scalar_select %p202, %s17, 1
      %s204 = smul.addr %s203, 4
      %s205 = scalar_lea.vmem %s2, %s204
      %p206 = scmp.eq.s32.totalorder %s18, 0
      // Predicated region
      $region29: #{sobel_forward.4} parent=27 // pred_check
        %p207 = pneg %p206
      $region30: #{sobel_forward.4} parent=27 // pred_check_branch
        %209 = sbr.rel (%p207) target = $region32
      $region31: #{sobel_forward.4} parent=27 // pred_region
        %vm210 = vcmask 27648
        %211 = vst.msk [vmem:[#allocation2] sm:$0xf] %vm210, 0.0
      $region32: #{sobel_forward.4} parent=27 // pred_fallthru
        _
      %v212 = vld [vmem:[#allocation2] sm:$0xf]
      %v213 = vld [vmem:[%s190] sm:$0xff]
      %v214 = vld [vmem:[%s200] sm:$0xff]
      %v216 = vcombine.high %v213, %v213
      %v219 = vcombine.high %v214, %v214
      %221 = vmatprep.subr.mxu0 %v219
      %222 = vmatpush1.xpose.msra.mxu0 %v214
      %223 = vmatprep.subr.mxu0 0.0
      %224 = vmatpush1.xpose.msra.mxu0 0.0
      %225 = vmatprep.subr.mxu0 0.0
      %226 = vmatpush1.xpose.msra.mxu0 0.0
      %227 = vmatprep.subr.mxu0 0.0
      %228 = vmatpush1.xpose.msra.mxu0 0.0
      %229 = vmatprep.subr.mxu0 0.0
      %230 = vmatpush1.xpose.msra.mxu0 0.0
      %231 = vmatprep.subr.mxu0 0.0
      %232 = vmatpush1.xpose.msra.mxu0 0.0
      %233 = vmatprep.subr.mxu0 0.0
      %234 = vmatpush1.xpose.msra.mxu0 0.0
      %235 = vmatprep.subr.mxu0 0.0
      %236 = vmatpush1.xpose.msra.mxu0 0.0
      %237 = vmatprep.subr.mxu0 0.0
      %238 = vmatpush1.xpose.msra.mxu0 0.0
      %239 = vmatprep.subr.mxu0 0.0
      %240 = vmatpush1.xpose.msra.mxu0 0.0
      %241 = vmatprep.subr.mxu0 0.0
      %242 = vmatpush1.xpose.msra.mxu0 0.0
      %243 = vmatprep.subr.mxu0 0.0
      %244 = vmatpush1.xpose.msra.mxu0 0.0
      %245 = vmatprep.subr.mxu0 0.0
      %246 = vmatpush1.xpose.msra.mxu0 0.0
      %247 = vmatprep.subr.mxu0 0.0
      %248 = vmatpush1.xpose.msra.mxu0 0.0
      %249 = vmatprep.subr.mxu0 0.0
      %250 = vmatpush1.xpose.msra.mxu0 0.0
      %251 = vmatprep.subr.mxu0 0.0
      %252 = vmatpush1.xpose.msra.mxu0 0.0
      %253 = vmatprep.subr.mxu0 0.0
      %254 = vmatpush1.xpose.msra.mxu0 0.0
      %255 = vmatprep.subr.mxu0 0.0
      %256 = vmatpush1.xpose.msra.mxu0 0.0
      %257 = vmatprep.subr.mxu0 0.0
      %258 = vmatpush1.xpose.msra.mxu0 0.0
      %259 = vmatprep.subr.mxu0 0.0
      %260 = vmatpush1.xpose.msra.mxu0 0.0
      %261 = vmatprep.subr.mxu0 0.0
      %262 = vmatpush1.xpose.msra.mxu0 0.0
      %263 = vmatprep.subr.mxu0 0.0
      %264 = vmatpush1.xpose.msra.mxu0 0.0
      %265 = vmatprep.subr.mxu0 0.0
      %266 = vmatpush1.xpose.msra.mxu0 0.0
      %267 = vmatprep.subr.mxu0 0.0
      %268 = vmatpush1.xpose.msra.mxu0 0.0
      %269 = vmatprep.subr.mxu0 0.0
      %270 = vmatpush1.xpose.msra.mxu0 0.0
      %271 = vmatprep.subr.mxu0 0.0
      %272 = vmatpush1.xpose.msra.mxu0 0.0
      %273 = vmatprep.subr.mxu0 0.0
      %274 = vmatpush1.xpose.msra.mxu0 0.0
      %275 = vmatprep.subr.mxu0 0.0
      %276 = vmatpush1.xpose.msra.mxu0 0.0
      %277 = vmatprep.subr.mxu0 0.0
      %278 = vmatpush1.xpose.msra.mxu0 0.0
      %279 = vmatprep.subr.mxu0 0.0
      %280 = vmatpush1.xpose.msra.mxu0 0.0
      %281 = vmatprep.subr.mxu0 0.0
      %282 = vmatpush1.xpose.msra.mxu0 0.0
      %283 = vmatprep.subr.mxu0 0.0
      %284 = vmatpush1.xpose.msra.mxu0 0.0
      %285 = vmatprep.mubr.f32.mxu0 %v216
      %286 = vmatmul.mubr.f32.gmra.mrb[0].mxu0 %v213
      %v287 = vpop.f32.mrb[0].mxu0
      %v288 = vadd.f32 0.0, %v287
      %v289 = vpop.f32.mrb[0].mxu0
      %290 = vdwg.mxu0
      %v291 = vadd.f32 %v212, %v288
      %vm292 = vcmask 27648
      %293 = vst.msk [vmem:[#allocation2] sm:$0xf] %vm292, %v291
      // Predicated region
      $region33: #{sobel_forward.4} parent=27 // pred_check
        %p294 = pneg %p206
      $region34: #{sobel_forward.4} parent=27 // pred_check_branch
        %296 = sbr.rel (%p294) target = $region36
      $region35: #{sobel_forward.4} parent=27 // pred_region
        %v297 = vld [vmem:[#allocation2] sm:$0xf]
        %298 = vst.msk [vmem:[%s205] sm:$0xf] %vm292, %v297
      $region36: #{sobel_forward.4} parent=27 // pred_fallthru
        _
      %p299 = scmp.lt.s32.totalorder %s17, 1
      %s300 = scalar_select %p299, %s17, 1
      %s301 = smul.addr %s300, 4
      %s302 = scalar_lea.vmem %s2, %s301
      // Predicated region
      $region37: #{sobel_forward.4} parent=27 // pred_check
        %p303 = pneg %p99
      $region38: #{sobel_forward.4} parent=27 // pred_check_branch
        %305 = sbr.rel (%p303) target = $region40
      $region39: #{sobel_forward.4} parent=27 // pred_region
        _
      $region40: #{sobel_forward.4} parent=27 // pred_fallthru
        _
    $region28: #{sobel_forward.4} parent=5 // pred_fallthru
      _
    %p306 = scmp.le.s32.totalorder 2, %s8
    // Predicated region
    $region41: #{sobel_forward.4} parent=5 // pred_check
      %p307 = pneg %p306
    $region42: #{sobel_forward.4} parent=5 // pred_check_branch
      %309 = sbr.rel (%p307) target = $region44
    $region43: #{sobel_forward.4} parent=5 // pred_region
      %s310 = ssub.s32 %s8, 2
      // Predicated region
      $region45: #{sobel_forward.4} parent=43 // pred_check
        %p311 = pneg %p105
      $region46: #{sobel_forward.4} parent=43 // pred_check_branch
        %313 = sbr.rel (%p311) target = $region48
      $region47: #{sobel_forward.4} parent=43 // pred_region
        %p314 = scmp.lt.s32.totalorder %s19, 1
        %s315 = scalar_select %p314, %s19, 1
        %s316 = smul.addr %s315, 4
        %s317 = scalar_lea.vmem %s2, %s316
      $region48: #{sobel_forward.4} parent=43 // pred_fallthru
        _
    $region44: #{sobel_forward.4} parent=5 // pred_fallthru
      _
  $region6: #{sobel_forward.4} parent=0 // loop_footer
    %s12 = sadd.s32 1, %s8
  $region7: #{sobel_forward.4} parent=0 // loop_footer_branch
    %7 = sbr.rel target = $region3
  $region8: #{sobel_forward.4} parent=0 // loop_exit
    _

// kernel: sobel_forward.3
$region0: #{sobel_forward.3}
  #allocation0 [shape = 'u32[]', space=smem, size = 0x4, offset = 0x4, fixed_abs, tag = 'smem constant byte address 0x4 - core index']
  #allocation1 [shape = 'u32[144,128]{1,0:T(1,128)}', space=vmem, size = 0x12000, scoped, tag = 'internal scratch']
  %s0 = inlined_call_operand.vmem [shape: f32[2,4,18,18], index: 0, kind: input, shape index: {}]
  %s1 = inlined_call_operand.vmem [shape: f32[2,16,16], index: 1, kind: output, shape index: {0}]
  %s2 = inlined_call_operand.vmem [shape: f32[2,16,16], index: 2, kind: output, shape index: {1}]
  %3 = xla_tuple %s1, %s2
  %s4 = sld [smem:[#allocation0]]
  $region45: #{sobel_forward.3} parent=0
    _
  %s6 = ssub.s32 1, %s4
  %s7 = scalar_select 0, %s6, %s4
  loop: start=0, step=1, limit=4
  $region2: #{sobel_forward.3} parent=0 // loop_pre_header
    _
  $region3: #{sobel_forward.3} parent=0 // loop_header
    %s9 = sphi 0, %s13
    %p10 = scmp.ge.s32.totalorder %s9, 4
    %s19 = sphi 0, %s21
    %s22 = sphi 0, %s19
    %s23 = sphi 0, %s22
    %s39 = sphi 0, %s23
    %s45 = sphi 0, %s47
    %s48 = sphi 0, %s45
    %s49 = sphi 0, %s48
    %s65 = sphi 0, %s49
    %s71 = sphi 0, %s73
    %s74 = sphi 0, %s71
    %s75 = sphi 0, %s74
    %s91 = sphi 0, %s75
  $region4: #{sobel_forward.3} parent=0 // loop_header_branch
    %12 = sbr.rel (%p10) target = $region8
  $region5: #{sobel_forward.3} parent=0 // loop_body
    %s14 = ssub.s32 %s9, 1
    %s15 = ssub.s32 %s9, 2
    %s16 = sadd.s32 %s9, 1
    %s17 = ssub.s32 %s9, %s16
    %p18 = scmp.eq.s32.totalorder %s17, 0
    %s20 = sadd.s32 %s19, 1
    %s21 = scalar_select %p18, %s19, %s20
    %p24 = pneg %p18
    %p25 = scmp.eq.s32.totalorder %s9, 1
    %p26 = por %p24, %p25
    %p27 = scmp.ne.s32.totalorder %s19, %s22
    %p28 = scmp.eq.s32.totalorder %s9, 0
    %p29 = por %p27, %p28
    %p30 = scmp.ne.s32.totalorder %s19, %s22
    %p31 = scmp.eq.s32.totalorder %s14, 1
    %p32 = por %p30, %p31
    %p33 = scmp.ne.s32.totalorder %s22, %s23
    %p34 = scmp.eq.s32.totalorder %s14, 0
    %p35 = por %p33, %p34
    %p36 = scmp.ne.s32.totalorder %s22, %s23
    %p37 = scmp.eq.s32.totalorder %s15, 1
    %p38 = por %p36, %p37
    %p40 = scmp.ne.s32.totalorder %s23, %s39
    %p41 = scmp.eq.s32.totalorder %s15, 0
    %p42 = por %p40, %p41
    %s43 = ssub.s32 %s9, %s16
    %p44 = scmp.eq.s32.totalorder %s43, 0
    %s46 = sadd.s32 %s45, 1
    %s47 = scalar_select %p44, %s45, %s46
    %p50 = pneg %p44
    %p51 = scmp.eq.s32.totalorder %s9, 1
    %p52 = por %p50, %p51
    %p53 = scmp.ne.s32.totalorder %s45, %s48
    %p54 = scmp.eq.s32.totalorder %s9, 0
    %p55 = por %p53, %p54
    %p56 = scmp.ne.s32.totalorder %s45, %s48
    %p57 = scmp.eq.s32.totalorder %s14, 1
    %p58 = por %p56, %p57
    %p59 = scmp.ne.s32.totalorder %s48, %s49
    %p60 = scmp.eq.s32.totalorder %s14, 0
    %p61 = por %p59, %p60
    %p62 = scmp.ne.s32.totalorder %s48, %s49
    %p63 = scmp.eq.s32.totalorder %s15, 1
    %p64 = por %p62, %p63
    %p66 = scmp.ne.s32.totalorder %s49, %s65
    %p67 = scmp.eq.s32.totalorder %s15, 0
    %p68 = por %p66, %p67
    %s69 = ssub.s32 %s9, %s16
    %p70 = scmp.eq.s32.totalorder %s69, 0
    %s72 = sadd.s32 %s71, 1
    %s73 = scalar_select %p70, %s71, %s72
    %p76 = pneg %p70
    %p77 = scmp.eq.s32.totalorder %s9, 1
    %p78 = por %p76, %p77
    %p79 = scmp.ne.s32.totalorder %s71, %s74
    %p80 = scmp.eq.s32.totalorder %s9, 0
    %p81 = por %p79, %p80
    %p82 = scmp.ne.s32.totalorder %s71, %s74
    %p83 = scmp.eq.s32.totalorder %s14, 1
    %p84 = por %p82, %p83
    %p85 = scmp.ne.s32.totalorder %s74, %s75
    %p86 = scmp.eq.s32.totalorder %s14, 0
    %p87 = por %p85, %p86
    %p88 = scmp.ne.s32.totalorder %s74, %s75
    %p89 = scmp.eq.s32.totalorder %s15, 1
    %p90 = por %p88, %p89
    %p92 = scmp.ne.s32.totalorder %s75, %s91
    %p93 = scmp.eq.s32.totalorder %s15, 0
    %p94 = por %p92, %p93
    %p95 = scmp.le.s32.totalorder 1, %s9
    %p96 = scmp.lt.s32.totalorder %s9, 3
    %p97 = pnand %p95, %p96
    %p98 = pneg %p97
    // Predicated region
    $region9: #{sobel_forward.3} parent=5 // pred_check
      _
    $region10: #{sobel_forward.3} parent=5 // pred_check_branch
      %100 = sbr.rel (%p97) target = $region12
    $region11: #{sobel_forward.3} parent=5 // pred_region
      %s101 = ssub.s32 %s9, 1
    $region12: #{sobel_forward.3} parent=5 // pred_fallthru
      _
    %p102 = scmp.lt.s32.totalorder %s9, 2
    // Predicated region
    $region13: #{sobel_forward.3} parent=5 // pred_check
      %p103 = pneg %p102
    $region14: #{sobel_forward.3} parent=5 // pred_check_branch
      %105 = sbr.rel (%p103) target = $region16
    $region15: #{sobel_forward.3} parent=5 // pred_region
      // Predicated region
      $region17: #{sobel_forward.3} parent=15 // pred_check
        %p106 = pneg %p29
      $region18: #{sobel_forward.3} parent=15 // pred_check_branch
        %108 = sbr.rel (%p106) target = $region20
      $region19: #{sobel_forward.3} parent=15 // pred_region
        %p109 = scmp.lt.s32.totalorder %s9, 1
        %s110 = scalar_select %p109, %s9, 1
        %s111 = smul.addr %s110, 12
        %s112 = smul.addr %s111, 8
        %s113 = scalar_lea.vmem %s0, %s112
      $region20: #{sobel_forward.3} parent=15 // pred_fallthru
        _
    $region16: #{sobel_forward.3} parent=5 // pred_fallthru
      _
    %p114 = scmp.le.s32.totalorder 1, %s9
    %p115 = scmp.lt.s32.totalorder %s9, 3
    %p116 = pnand %p114, %p115
    %p117 = pneg %p116
    // Predicated region
    $region21: #{sobel_forward.3} parent=5 // pred_check
      _
    $region22: #{sobel_forward.3} parent=5 // pred_check_branch
      %119 = sbr.rel (%p116) target = $region24
    $region23: #{sobel_forward.3} parent=5 // pred_region
      %s120 = ssub.s32 %s9, 1
      %p121 = scmp.lt.s32.totalorder %s14, 1
      %s122 = scalar_select %p121, %s14, 1
      %s123 = smul.addr %s122, 12
      %s124 = smul.addr %s123, 8
      %s125 = scalar_lea.vmem %s0, %s124
      %p126 = pneg %p35
      %p127 = pneg %p32
      %p128 = pneg %p61
      %p129 = pneg %p58
      %p130 = scmp.lt.s32.totalorder %s14, 1
      %s131 = scalar_select %p130, %s14, 1
      %s132 = smul.addr %s131, 2
      %s133 = smul.addr %s132, 8
      %s134 = scalar_lea.vmem %s1, %s133
      %p135 = pneg %p87
      %p136 = pneg %p84
      %p137 = scmp.lt.s32.totalorder %s14, 1
      %s138 = scalar_select %p137, %s14, 1
      %s139 = smul.addr %s138, 2
      %s140 = smul.addr %s139, 8
      %s141 = scalar_lea.vmem %s2, %s140
      %p142 = scmp.lt.s32.totalorder %s14, 1
      %s143 = scalar_select %p142, %s14, 1
      %s144 = smul.addr %s143, 12
      %s145 = smul.addr %s144, 8
      %s146 = scalar_lea.vmem %s0, %s145
      %p147 = scmp.lt.s32.totalorder %s14, 1
      %s148 = scalar_select %p147, %s14, 1
      %s149 = smul.addr %s148, 2
      %s150 = smul.addr %s149, 8
      %s151 = scalar_lea.vmem %s1, %s150
      %p152 = scmp.lt.s32.totalorder %s14, 1
      %s153 = scalar_select %p152, %s14, 1
      %s154 = smul.addr %s153, 2
      %s155 = smul.addr %s154, 8
      %s156 = scalar_lea.vmem %s2, %s155
      %v157 = vld [vmem:[%s146] sm:$0xff]
      %v158 = vld [vmem:[%s146 + $0x8] sm:$0xff]
      %v159 = vld [vmem:[%s146 + $0x10] sm:$0x3]
      %v160 = vld [vmem:[%s146 + $0x18] sm:$0xff]
      %v161 = vld [vmem:[%s146 + $0x20] sm:$0xff]
      %v162 = vld [vmem:[%s146 + $0x28] sm:$0x3]
      %v163 = vld [vmem:[%s146 + $0x30] sm:$0xff]
      %v164 = vld [vmem:[%s146 + $0x38] sm:$0xff]
      %v165 = vld [vmem:[%s146 + $0x40] sm:$0x3]
      %v166 = vld [vmem:[%s146 + $0x48] sm:$0xff]
      %v167 = vld [vmem:[%s146 + $0x50] sm:$0xff]
      %v168 = vld [vmem:[%s146 + $0x58] sm:$0x3]
      %vm169 = vcmask 146432
      %v170 = vsel %vm169, %v157, 0.0
      %v171 = vsel %vm169, %v160, 0.0
      %v172 = vadd.f32 %v170, %v171
      %v173 = vsel %vm169, %v163, 0.0
      %v174 = vadd.f32 %v172, %v173
      %v175 = vsel %vm169, %v166, 0.0
      %v176 = vadd.f32 %v174, %v175
      %v177 = vsel %vm169, %v158, 0.0
      %v178 = vsel %vm169, %v161, 0.0
      %v179 = vadd.f32 %v177, %v178
      %v180 = vsel %vm169, %v164, 0.0
      %v181 = vadd.f32 %v179, %v180
      %v182 = vsel %vm169, %v167, 0.0
      %v183 = vadd.f32 %v181, %v182
      %vm184 = vcmask 140288
      %v185 = vsel %vm184, %v159, 0.0
      %v186 = vsel %vm184, %v162, 0.0
      %v187 = vadd.f32 %v185, %v186
      %v188 = vsel %vm184, %v165, 0.0
      %v189 = vadd.f32 %v187, %v188
      %v190 = vsel %vm184, %v168, 0.0
      %v191 = vadd.f32 %v189, %v190
      %v192 = vmul.f32 %v176, -1.0
      %v193 = vmul.f32 %v183, -1.0
      %v194 = vmul.f32 %v176, -2.0
      %v195 = vmul.f32 %v183, -2.0
      %198 = vrot.lane.b32.xlu0 %v194, 127
      %v199 = vpop.permute.xlu0 %198
      %200 = vrot.lane.b32.xlu0 %v195, 127
      %v201 = vpop.permute.xlu0 %200
      %v204 = vadd.f32 %v192, %v199
      %v205 = vadd.f32 %v193, %v201
      %208 = vrot.lane.b32.xlu0 %v176, 126
      %v209 = vpop.permute.xlu0 %208
      %210 = vrot.lane.b32.xlu0 %v183, 126
      %v211 = vpop.permute.xlu0 %210
      %v214 = vadd.f32 %v192, %v209
      %v215 = vadd.f32 %v193, %v211
      %218 = vrot.lane.b32.xlu0 %v192, 126
      %v219 = vpop.permute.xlu0 %218
      %220 = vrot.lane.b32.xlu0 %v193, 126
      %v221 = vpop.permute.xlu0 %220
      %v224 = vadd.f32 %v204, %v219
      %v225 = vadd.f32 %v205, %v221
      %v226 = vmul.f32 %v191, -2.0
      %vm228 = vcmask 1046528
      %v229 = vrot.slane %v194, 1
      %v230 = vrot.slane %v195, 1
      %v231 = vsel %vm228, %v229, %v230
      %v232 = vrot.slane %v226, 1
      %v233 = vsel %vm228, %v230, %v232
      %v236 = vadd.f32 %v214, %v231
      %v237 = vadd.f32 %v215, %v233
      %v238 = vmul.f32 %v176, 2.0
      %v239 = vmul.f32 %v183, 2.0
      %v240 = vmul.f32 %v191, 2.0
      %v244 = vrot.slane %v238, 1
      %v245 = vrot.slane %v239, 1
      %v246 = vsel %vm228, %v244, %v245
      %v247 = vrot.slane %v240, 1
      %v248 = vsel %vm228, %v245, %v247
      %249 = vrot.lane.b32.xlu0 %v246, 126
      %v250 = vpop.permute.xlu0 %249
      %251 = vrot.lane.b32.xlu0 %v248, 126
      %v252 = vpop.permute.xlu0 %251
      %v255 = vadd.f32 %v236, %v250
      %v256 = vadd.f32 %v237, %v252
      %v257 = vmul.f32 %v191, -1.0
      %vm259 = vcmask 1045504
      %v260 = vrot.slane %v192, 2
      %v261 = vrot.slane %v193, 2
      %v262 = vsel %vm259, %v260, %v261
      %v263 = vrot.slane %v257, 2
      %v264 = vsel %vm259, %v261, %v263
      %v267 = vadd.f32 %v255, %v262
      %v268 = vadd.f32 %v256, %v264
      %v270 = vrot.slane %v176, 2
      %v271 = vrot.slane %v183, 2
      %v272 = vsel %vm259, %v270, %v271
      %v273 = vrot.slane %v191, 2
      %v274 = vsel %vm259, %v271, %v273
      %v277 = vadd.f32 %v224, %v272
      %v278 = vadd.f32 %v225, %v274
      %v279 = vrot.slane %v238, 2
      %v280 = vrot.slane %v239, 2
      %v281 = vsel %vm259, %v279, %v280
      %v282 = vrot.slane %v240, 2
      %v283 = vsel %vm259, %v280, %v282
      %284 = vrot.lane.b32.xlu0 %v281, 127
      %v285 = vpop.permute.xlu0 %284
      %286 = vrot.lane.b32.xlu0 %v283, 127
      %v287 = vpop.permute.xlu0 %286
      %v290 = vadd.f32 %v277, %v285
      %v291 = vadd.f32 %v278, %v287
      %292 = vrot.lane.b32.xlu0 %v272, 126
      %v293 = vpop.permute.xlu0 %292
      %294 = vrot.lane.b32.xlu0 %v274, 126
      %v295 = vpop.permute.xlu0 %294
      %v298 = vadd.f32 %v267, %v293
      %v299 = vadd.f32 %v268, %v295
      %v300 = vadd.f32 %v290, %v293
      %v301 = vadd.f32 %v291, %v295
      %v302 = vand.u32 2147483647, %v298
      %v303 = vand.u32 2147483647, %v299
      %vm304 = vcmask 130048
      %305 = vst.msk [vmem:[%s151] sm:$0xff] %vm304, %v302
      %306 = vst.msk [vmem:[%s151 + $0x8] sm:$0xff] %vm304, %v303
      %v307 = vand.u32 2147483647, %v300
      %v308 = vand.u32 2147483647, %v301
      %309 = vst.msk [vmem:[%s156] sm:$0xff] %vm304, %v307
      %310 = vst.msk [vmem:[%s156 + $0x8] sm:$0xff] %vm304, %v308
      %p311 = scmp.lt.s32.totalorder %s14, 1
      %s312 = scalar_select %p311, %s14, 1
      %s313 = smul.addr %s312, 2
      %s314 = smul.addr %s313, 8
      %s315 = scalar_lea.vmem %s1, %s314
      %p316 = scmp.lt.s32.totalorder %s14, 1
      %s317 = scalar_select %p316, %s14, 1
      %s318 = smul.addr %s317, 2
      %s319 = smul.addr %s318, 8
      %s320 = scalar_lea.vmem %s2, %s319
      // Predicated region
      $region25: #{sobel_forward.3} parent=23 // pred_check
        %p321 = pneg %p58
      $region26: #{sobel_forward.3} parent=23 // pred_check_branch
        %323 = sbr.rel (%p321) target = $region28
      $region27: #{sobel_forward.3} parent=23 // pred_region
        _
      $region28: #{sobel_forward.3} parent=23 // pred_fallthru
        _
      // Predicated region
      $region29: #{sobel_forward.3} parent=23 // pred_check
        %p324 = pneg %p84
      $region30: #{sobel_forward.3} parent=23 // pred_check_branch
        %326 = sbr.rel (%p324) target = $region32
      $region31: #{sobel_forward.3} parent=23 // pred_region
        _
      $region32: #{sobel_forward.3} parent=23 // pred_fallthru
        _
    $region24: #{sobel_forward.3} parent=5 // pred_fallthru
      _
    %p327 = scmp.le.s32.totalorder 2, %s9
    // Predicated region
    $region33: #{sobel_forward.3} parent=5 // pred_check
      %p328 = pneg %p327
    $region34: #{sobel_forward.3} parent=5 // pred_check_branch
      %330 = sbr.rel (%p328) target = $region36
    $region35: #{sobel_forward.3} parent=5 // pred_region
      %s331 = ssub.s32 %s9, 2
      // Predicated region
      $region37: #{sobel_forward.3} parent=35 // pred_check
        %p332 = pneg %p64
      $region38: #{sobel_forward.3} parent=35 // pred_check_branch
        %334 = sbr.rel (%p332) target = $region40
      $region39: #{sobel_forward.3} parent=35 // pred_region
        %p335 = scmp.lt.s32.totalorder %s15, 1
        %s336 = scalar_select %p335, %s15, 1
        %s337 = smul.addr %s336, 2
        %s338 = smul.addr %s337, 8
        %s339 = scalar_lea.vmem %s1, %s338
      $region40: #{sobel_forward.3} parent=35 // pred_fallthru
        _
      // Predicated region
      $region41: #{sobel_forward.3} parent=35 // pred_check
        %p340 = pneg %p90
      $region42: #{sobel_forward.3} parent=35 // pred_check_branch
        %342 = sbr.rel (%p340) target = $region44
      $region43: #{sobel_forward.3} parent=35 // pred_region
        %p343 = scmp.lt.s32.totalorder %s15, 1
        %s344 = scalar_select %p343, %s15, 1
        %s345 = smul.addr %s344, 2
        %s346 = smul.addr %s345, 8
        %s347 = scalar_lea.vmem %s2, %s346
      $region44: #{sobel_forward.3} parent=35 // pred_fallthru
        _
    $region36: #{sobel_forward.3} parent=5 // pred_fallthru
      _
  $region6: #{sobel_forward.3} parent=0 // loop_footer
    %s13 = sadd.s32 1, %s9
  $region7: #{sobel_forward.3} parent=0 // loop_footer_branch
    %8 = sbr.rel target = $region3
  $region8: #{sobel_forward.3} parent=0 // loop_exit
    _

</llo_original>
